<compile_context>
chip_gen: v7x
topology: tpu7x:2x2x1
jax: 0.10.0
libtpu: 0.0.40
codegen_flags: <defaults>
</compile_context>

<pallas_src>
import functools
import math

import jax
import jax.numpy as jnp
import numpy as np
from jax.experimental import pallas as pl
from jax.experimental.pallas import tpu as pltpu


# ----------------------------------------------------------------------------
# Tiling helpers
# ----------------------------------------------------------------------------
def _pick_tile(dim, cap, align):
    """Largest tile <= cap that divides `dim` and is `align`-aligned; the full
    dim if dim <= cap (a full-dim block is always layout-legal).
    TODO(synk): ragged dims that have no aligned divisor fall back to the full
    dim; prefer cdiv grids + masked remainder for very large ragged shapes."""
    if dim <= cap:
        return dim
    t = (cap // align) * align
    while t >= align:
        if dim % t == 0:
            return t
        t -= align
    return dim


def _pick_head_block(n_heads, head_dim):
    """Smallest head-block Hb dividing n_heads with Hb*head_dim % 128 == 0
    (lane-dense output block). Falls back to all heads (full-E block, always
    layout-legal)."""
    for hb in range(1, n_heads + 1):
        if n_heads % hb == 0 and (hb * head_dim) % 128 == 0:
            return hb
    return n_heads


# ----------------------------------------------------------------------------
# Tiled linear kernel:  out = x @ w_t + b   (x:(M,K), w_t:(K,N), b:(1,N))
# bf16-in / f32-accumulate; bias added in f32; output cast once.
# ----------------------------------------------------------------------------
def _linear_kernel(x_ref, w_ref, b_ref, o_ref, acc_ref, *, compute_dtype):
    k = pl.program_id(2)

    @pl.when(k == 0)
    def _():
        acc_ref[...] = jnp.zeros_like(acc_ref)

    acc_ref[...] += jnp.dot(
        x_ref[...].astype(compute_dtype),
        w_ref[...].astype(compute_dtype),
        preferred_element_type=jnp.float32,
    )

    @pl.when(k == pl.num_programs(2) - 1)
    def _():
        o_ref[...] = (acc_ref[...] + b_ref[...].astype(jnp.float32)).astype(o_ref.dtype)


def pallas_linear(x, w, b, *, compute_dtype=jnp.bfloat16, out_dtype=None,
                  tm_cap=512, tn_cap=512, tk_cap=1024):
    """x: (M, K); w: (N, K) (torch layout); b: (N,) -> (M, N)."""
    M, K = x.shape
    N, K2 = w.shape
    assert K == K2
    if out_dtype is None:
        out_dtype = x.dtype

    tm = _pick_tile(M, tm_cap, 8)      # second-minor: multiple of 8 or full
    tn = _pick_tile(N, tn_cap, 128)    # minor: multiple of 128 or full
    tk = _pick_tile(K, tk_cap, 128)

    # Pre-transpose the weight once so the kernel does a plain (tk x tn)
    # contraction -- no per-K-step transposed-RHS handling on the MXU path.
    w_t = jnp.transpose(w)             # (K, N)
    b2 = b.reshape(1, N)

    kernel = functools.partial(_linear_kernel, compute_dtype=compute_dtype)
    return pl.pallas_call(
        kernel,
        out_shape=jax.ShapeDtypeStruct((M, N), out_dtype),
        grid=(M // tm, N // tn, K // tk),
        in_specs=[
            pl.BlockSpec((tm, tk), lambda i, j, k: (i, k)),
            pl.BlockSpec((tk, tn), lambda i, j, k: (k, j)),
            pl.BlockSpec((1, tn), lambda i, j, k: (0, j)),
        ],
        out_specs=pl.BlockSpec((tm, tn), lambda i, j, k: (i, j)),
        scratch_shapes=[pltpu.VMEM((tm, tn), jnp.float32)],
        compiler_params=pltpu.CompilerParams(
            dimension_semantics=("parallel", "parallel", "arbitrary"),
            vmem_limit_bytes=48 * 1024 * 1024,   # fits v7x's 64 MiB with headroom
        ),
    )(x, w_t, b2)


# ----------------------------------------------------------------------------
# Attention kernel.
#   qkv layout (3, B, H, T, D); grid = (B, H//Hb, T//tq), query axis innermost
#   so the (Hb, S, D) K/V blocks stay VMEM-resident across all query blocks.
#   Context written lane-dense into a (B, T, E) slab; optional per-head-block
#   summed softmax written once per step (no resident accumulator needed).
# ----------------------------------------------------------------------------
def _make_attn_kernel(scale, compute_dtype, head_dim, need_weights):
    def kernel(q_ref, k_ref, v_ref, o_ref, *maybe_w):
        q = q_ref[...].astype(compute_dtype)          # (Hb, tq, D)
        k = k_ref[...].astype(compute_dtype)          # (Hb, S,  D)
        v = v_ref[...].astype(compute_dtype)          # (Hb, S,  D)

        # batched q @ k^T (MXU, bf16 in, f32 acc); scale fused in f32
        s = jnp.einsum("hqd,hkd->hqk", q, k,
                       preferred_element_type=jnp.float32)    # (Hb, tq, S)
        s = s * scale

        m = jnp.max(s, axis=-1, keepdims=True)
        e = jnp.exp(s - m)
        l = jnp.sum(e, axis=-1, keepdims=True)
        p = e / l                                     # exact softmax (f32)

        o = jnp.einsum("hqk,hkd->hqd", p.astype(compute_dtype), v,
                       preferred_element_type=jnp.float32)    # (Hb, tq, D)

        # Merge heads into the lane-dense (tq, Hb*D) output block; the HBM
        # writeback of this block is a full-lane (>=128 or full-E) store.
        hb_sz = o.shape[0]
        for h in range(hb_sz):                        # static unroll, Hb small
            o_ref[:, h * head_dim:(h + 1) * head_dim] = o[h].astype(o_ref.dtype)

        if need_weights:
            w_ref = maybe_w[0]
            w_ref[...] = jnp.sum(p, axis=0).astype(w_ref.dtype)

    return kernel


def pallas_attention(qkv, scale, *, need_weights=True, tq_cap=128,
                     compute_dtype=jnp.bfloat16, out_dtype=None):
    """qkv: (3, B, H, T, D) -> (context (B, T, H*D), weight-sums or None).

    weight-sums has shape (B, H//Hb, T, T): softmax summed over the Hb heads
    of each head block; caller finishes the mean over heads."""
    three, B, H, T, D = qkv.shape
    assert three == 3
    S = T
    if out_dtype is None:
        out_dtype = qkv.dtype

    tq = _pick_tile(T, tq_cap, 8)
    Hb = _pick_head_block(H, D)

    kernel = _make_attn_kernel(scale, compute_dtype, D, need_weights)

    out_shapes = [jax.ShapeDtypeStruct((B, T, H * D), out_dtype)]
    out_specs = [pl.BlockSpec((None, tq, Hb * D), lambda b, hb, qi: (b, qi, hb))]
    if need_weights:
        out_shapes.append(jax.ShapeDtypeStruct((B, H // Hb, T, S), jnp.float32))
        out_specs.append(
            pl.BlockSpec((None, None, tq, S), lambda b, hb, qi: (b, hb, qi, 0)))

    res = pl.pallas_call(
        kernel,
        out_shape=tuple(out_shapes),
        grid=(B, H // Hb, T // tq),        # qi innermost -> K/V blocks resident
        in_specs=[
            # same qkv array three times; first axis selects the q / k / v slot
            pl.BlockSpec((None, None, Hb, tq, D), lambda b, hb, qi: (0, b, hb, qi, 0)),
            pl.BlockSpec((None, None, Hb, S, D), lambda b, hb, qi: (1, b, hb, 0, 0)),
            pl.BlockSpec((None, None, Hb, S, D), lambda b, hb, qi: (2, b, hb, 0, 0)),
        ],
        out_specs=tuple(out_specs),
        compiler_params=pltpu.CompilerParams(
            dimension_semantics=("parallel", "parallel", "arbitrary"),
            vmem_limit_bytes=48 * 1024 * 1024,
        ),
    )(qkv, qkv, qkv)

    if need_weights:
        return res[0], res[1]
    return res[0], None


# ----------------------------------------------------------------------------
# Module-equivalent wrapper (self-attention path)
# ----------------------------------------------------------------------------
def multihead_attn_forward(query, params, n_heads, *, need_weights=True,
                           compute_dtype=jnp.bfloat16):
    tlen, bsz, embed_dim = query.shape
    head_dim = embed_dim // n_heads
    scale = head_dim ** (-0.5)

    # in-projection: (T*B, E) -> (T*B, 3E), written in bf16 (compute dtype)
    x = query.reshape(tlen * bsz, embed_dim)
    qkv = pallas_linear(x, params["in_weight"], params["in_bias"],
                        compute_dtype=compute_dtype, out_dtype=compute_dtype)

    # (T*B, 3E) -> (3, B, H, T, D): one half-width (bf16) relayout so the
    # attention BlockSpecs see clean (Hb, len, D) tiles with small Hb.
    # TODO(synk): fold this relayout into the attention BlockSpecs if the
    # (tq, ..., Hb, D) strided-tile read measures cheaper.
    qkv = qkv.reshape(tlen, bsz, 3, n_heads, head_dim)
    qkv = jnp.transpose(qkv, (2, 1, 3, 0, 4))

    attn, wsum = pallas_attention(qkv, scale, need_weights=need_weights,
                                  compute_dtype=compute_dtype)

    # attn already head-merged and lane-dense: (B, T, E) -> (T*B, E)
    attn = jnp.transpose(attn, (1, 0, 2)).reshape(tlen * bsz, embed_dim)

    out = pallas_linear(attn, params["out_weight"], params["out_bias"],
                        compute_dtype=compute_dtype, out_dtype=query.dtype)
    out = out.reshape(tlen, bsz, embed_dim)

    if need_weights:
        weights = jnp.sum(wsum, axis=1) / n_heads      # (B, T, S), f32
    else:
        weights = None
    return out, weights


# ----------------------------------------------------------------------------
# Deterministic parameter init (matches __init__ shapes; xavier uniform)
# ----------------------------------------------------------------------------
def init_params(key, embed_dim):
    def xavier_uniform(k, shape):
        fan_out, fan_in = shape
        bound = math.sqrt(6.0 / (fan_in + fan_out))
        return jax.random.uniform(k, shape, jnp.float32, -bound, bound)

    k1, k2 = jax.random.split(key)
    return {
        "in_weight": xavier_uniform(k1, (3 * embed_dim, embed_dim)),
        "in_bias": jnp.zeros((3 * embed_dim,), jnp.float32),
        "out_weight": xavier_uniform(k2, (embed_dim, embed_dim)),
        "out_bias": jnp.zeros((embed_dim,), jnp.float32),
    }


# ----------------------------------------------------------------------------
# Pure-JAX f32 reference for correctness check
# ----------------------------------------------------------------------------
def reference_forward(query, params, n_heads):
    tlen, bsz, E = query.shape
    hd = E // n_heads
    scale = hd ** (-0.5)
    qkv = query @ params["in_weight"].T + params["in_bias"]
    q, k, v = jnp.split(qkv, 3, axis=-1)
    q = q * scale
    to_h = lambda t: t.reshape(tlen, bsz * n_heads, hd).transpose(1, 0, 2)
    qh, kh, vh = to_h(q), to_h(k), to_h(v)
    s = jnp.einsum("btd,bsd->bts", qh, kh)
    p = jax.nn.softmax(s, axis=-1)
    a = jnp.einsum("bts,bsd->btd", p, vh)
    a = a.transpose(1, 0, 2).reshape(tlen, bsz, E)
    out = a @ params["out_weight"].T + params["out_bias"]
    w = p.reshape(bsz, n_heads, tlen, tlen).sum(axis=1) / n_heads
    return out, w


if __name__ == "__main__":
    tlen, bsz, embed_dim, n_heads = 8, 2, 32, 4

    key = jax.random.PRNGKey(0)
    kq, kp = jax.random.split(key)
    query = jax.random.normal(kq, (tlen, bsz, embed_dim), jnp.float32)
    params = init_params(kp, embed_dim)

    attn, attn_weights = multihead_attn_forward(query, params, n_heads,
                                                need_weights=True)
    attn = jax.block_until_ready(attn)
    attn_weights = jax.block_until_ready(attn_weights)

    ref_attn, ref_w = reference_forward(query, params, n_heads)
    # bf16-in / f32-accumulate matmuls -> allow ~1e-2 level tolerance
    assert np.allclose(np.asarray(attn), np.asarray(ref_attn), atol=3e-2, rtol=3e-2)
    assert np.allclose(np.asarray(attn_weights), np.asarray(ref_w), atol=3e-2, rtol=3e-2)

    print("KERNEL_OK")
</pallas_src>

<mosaic_0001>
module attributes {stable_mosaic.version = 11 : i64} {
  func.func @_linear_kernel(%arg0: i32, %arg1: i32, %arg2: i32, %arg3: memref<16x32xf32, #tpu.memory_space<vmem>>, %arg4: memref<32x96xf32, #tpu.memory_space<vmem>>, %arg5: memref<1x96xf32, #tpu.memory_space<vmem>>, %arg6: memref<16x96xbf16, #tpu.memory_space<vmem>>, %arg7: memref<16x96xf32, #tpu.memory_space<vmem>>) attributes {dimension_semantics = [#tpu.dimension_semantics<parallel>, #tpu.dimension_semantics<parallel>, #tpu.dimension_semantics<arbitrary>], iteration_bounds = array<i64: 1, 1, 1>, scalar_prefetch = 0 : i64, scratch_operands = 1 : i64, tpu.core_type = #tpu.core_type<tc>, window_params = [{transform_indices = @transform_0, window_bounds = array<i64: 16, 32>}, {transform_indices = @transform_1, window_bounds = array<i64: 32, 96>}, {transform_indices = @transform_2, window_bounds = array<i64: 1, 96>}, {transform_indices = @transform_3, window_bounds = array<i64: 16, 96>}]} {
    %c0_i32 = arith.constant 0 : i32
    %0 = arith.cmpi eq, %arg2, %c0_i32 : i32
    %1 = arith.extui %0 : i1 to i32
    %c0_i32_0 = arith.constant 0 : i32
    %2 = arith.cmpi ne, %1, %c0_i32_0 : i32
    scf.if %2 {
      %cst_10 = arith.constant 0.000000e+00 : f32
      %14 = vector.broadcast %cst_10 : f32 to vector<16x96xf32>
      %c0_11 = arith.constant 0 : index
      %c0_12 = arith.constant 0 : index
      %15 = vector.load %arg7[%c0_11, %c0_12] : memref<16x96xf32, #tpu.memory_space<vmem>>, vector<16x96xf32>
      tpu.vector_store %arg7[%c0_11, %c0_12], %14 {strides = array<i32>} : memref<16x96xf32, #tpu.memory_space<vmem>>, vector<16x96xf32>,
    } else {
    }
    %c0 = arith.constant 0 : index
    %c0_1 = arith.constant 0 : index
    %3 = vector.load %arg7[%c0, %c0_1] : memref<16x96xf32, #tpu.memory_space<vmem>>, vector<16x96xf32>
    %c0_2 = arith.constant 0 : index
    %c0_3 = arith.constant 0 : index
    %4 = vector.load %arg3[%c0_2, %c0_3] : memref<16x32xf32, #tpu.memory_space<vmem>>, vector<16x32xf32>
    %5 = arith.truncf %4 : vector<16x32xf32> to vector<16x32xbf16>
    %c0_4 = arith.constant 0 : index
    %c0_5 = arith.constant 0 : index
    %6 = vector.load %arg4[%c0_4, %c0_5] : memref<32x96xf32, #tpu.memory_space<vmem>>, vector<32x96xf32>
    %7 = arith.truncf %6 : vector<32x96xf32> to vector<32x96xbf16>
    %cst = arith.constant dense<0.000000e+00> : vector<16x96xf32>
    %8 = tpu.matmul %5, %7, %cst {dimension_numbers = #tpu.dot_dimension_numbers<[1], [0], [0], [1], [0, 0, 1, 1], [], []>} : vector<16x32xbf16>, vector<32x96xbf16>, vector<16x96xf32> -> vector<16x96xf32>
    %9 = arith.addf %3, %8 : vector<16x96xf32>
    %c0_6 = arith.constant 0 : index
    %c0_7 = arith.constant 0 : index
    %10 = vector.load %arg7[%c0_6, %c0_7] : memref<16x96xf32, #tpu.memory_space<vmem>>, vector<16x96xf32>
    tpu.vector_store %arg7[%c0_6, %c0_7], %9 {strides = array<i32>} : memref<16x96xf32, #tpu.memory_space<vmem>>, vector<16x96xf32>,
    %c0_i32_8 = arith.constant 0 : i32
    %11 = arith.cmpi eq, %arg2, %c0_i32_8 : i32
    %12 = arith.extui %11 : i1 to i32
    %c0_i32_9 = arith.constant 0 : i32
    %13 = arith.cmpi ne, %12, %c0_i32_9 : i32
    scf.if %13 {
      %c0_10 = arith.constant 0 : index
      %c0_11 = arith.constant 0 : index
      %14 = vector.load %arg7[%c0_10, %c0_11] : memref<16x96xf32, #tpu.memory_space<vmem>>, vector<16x96xf32>
      %c0_12 = arith.constant 0 : index
      %c0_13 = arith.constant 0 : index
      %15 = vector.load %arg5[%c0_12, %c0_13] : memref<1x96xf32, #tpu.memory_space<vmem>>, vector<1x96xf32>
      %16 = vector.broadcast %15 : vector<1x96xf32> to vector<16x96xf32>
      %17 = arith.addf %14, %16 : vector<16x96xf32>
      %18 = arith.truncf %17 : vector<16x96xf32> to vector<16x96xbf16>
      %c0_14 = arith.constant 0 : index
      %c0_15 = arith.constant 0 : index
      %19 = vector.load %arg6[%c0_14, %c0_15] : memref<16x96xbf16, #tpu.memory_space<vmem>>, vector<16x96xbf16>
      tpu.vector_store %arg6[%c0_14, %c0_15], %18 {strides = array<i32>} : memref<16x96xbf16, #tpu.memory_space<vmem>>, vector<16x96xbf16>,
    } else {
    }
    return
  }
  func.func @transform_0(%arg0: i32, %arg1: i32, %arg2: i32) -> (i32, i32) {
    %c0_i32 = arith.constant 0 : i32
    return %arg0, %arg2 : i32, i32
  }
  func.func @transform_1(%arg0: i32, %arg1: i32, %arg2: i32) -> (i32, i32) {
    %c0_i32 = arith.constant 0 : i32
    return %arg2, %arg1 : i32, i32
  }
  func.func @transform_2(%arg0: i32, %arg1: i32, %arg2: i32) -> (i32, i32) {
    %c0_i32 = arith.constant 0 : i32
    %c0_i32_0 = arith.constant 0 : i32
    return %c0_i32, %arg1 : i32, i32
  }
  func.func @transform_3(%arg0: i32, %arg1: i32, %arg2: i32) -> (i32, i32) {
    %c0_i32 = arith.constant 0 : i32
    return %arg0, %arg1 : i32, i32
  }
}

</mosaic_0001>

<llo_original>
// kernel: tpu_custom_call.1
$region0: #{tpu_custom_call.1}
  #allocation0 [shape = 'u32[]', space=smem, size = 0x4, offset = 0x4, fixed_abs, tag = 'smem constant byte address 0x4 - core index']
  #allocation1 [shape = 'u32[144,128]{1,0:T(1,128)}', space=vmem, size = 0x12000, scoped, tag = 'internal scratch']
  #allocation2 [shape = 'f32[16,96]{1,0:T(8,128)}', space=vmem, size = 0x2000, scoped, tag = 'scratch operand']
  %s0 = inlined_call_operand.hbm [shape: f32[16,32], index: 0, kind: input, shape index: {}]
  %s1 = inlined_call_operand.hbm [shape: f32[32,96], index: 1, kind: input, shape index: {}]
  %s2 = inlined_call_operand.vmem [shape: f32[1,96], index: 2, kind: input, shape index: {}]
  %s3 = inlined_call_operand.hbm [shape: bf16[16,96], index: 3, kind: output, shape index: {}]
  %s4 = sld [smem:[#allocation0]]
  $region38: #{tpu_custom_call.1} parent=0
    _
  %s6 = ssub.s32 1, %s4
  %s7 = scalar_select 0, %s6, %s4
  $region1: #{tpu_custom_call.1} parent=0
    #allocation3 [shape = 'u8[8192]{0}', space=vmem, size = 0x2000, scoped, tag = 'input window, operand 0, single buffered']
    #allocation4 [shape = 's32[1]{0}', space=sflag, size = 0x4, scoped, tag = 'scoped memory for tpu_custom_call.1']
    #allocation5 [shape = 's32[1]{0}', space=sflag, size = 0x4, scoped, tag = 'scoped memory for tpu_custom_call.1']
    #allocation6 [shape = 'u8[16384]{0}', space=vmem, size = 0x4000, scoped, tag = 'input window, operand 1, single buffered']
    #allocation7 [shape = 's32[1]{0}', space=sflag, size = 0x4, scoped, tag = 'scoped memory for tpu_custom_call.1']
    #allocation8 [shape = 'u8[4096]{0}', space=vmem, size = 0x1000, scoped, tag = 'output window, operand 0, single buffered']
    %8 = vsyncpa [#allocation4], 0
    %9 = vsyncpa [#allocation7], 0
    %10 = vsyncpa [#allocation5], 0
    // Predicated region
    $region2: #{tpu_custom_call.1} parent=1 // pred_check
      _
    $region3: #{tpu_custom_call.1} parent=1 // pred_check_branch
      %12 = sbr.rel (0) target = $region5
    $region4: #{tpu_custom_call.1} parent=1 // pred_region
      %s14 = ssub.s32 256, 256
      %15 = vsyncadd [#allocation4], %s14
      %s16 = sshll.u32 [#allocation3], 4
      %s17 = int_to_ptr.vmem [resolvable:$true] %s16
      %22 = dma.hbm_to_vmem [thread:$0]  %s0, 256, %s17, [#allocation4], 128, 128, 8
    $region5: #{tpu_custom_call.1} parent=1 // pred_fallthru
      _
    // Predicated region
    $region6: #{tpu_custom_call.1} parent=1 // pred_check
      _
    $region7: #{tpu_custom_call.1} parent=1 // pred_check_branch
      %24 = sbr.rel (0) target = $region9
    $region8: #{tpu_custom_call.1} parent=1 // pred_region
      %s26 = ssub.s32 512, 512
      %27 = vsyncadd [#allocation7], %s26
      %s28 = sshll.u32 [#allocation6], 4
      %s29 = int_to_ptr.vmem [resolvable:$true] %s28
      %34 = dma.hbm_to_vmem [thread:$0]  %s1, 512, %s29, [#allocation7], 128, 128, 8
    $region9: #{tpu_custom_call.1} parent=1 // pred_fallthru
      _
    // Predicated region
    $region10: #{tpu_custom_call.1} parent=1 // pred_check
      _
    $region11: #{tpu_custom_call.1} parent=1 // pred_check_branch
      %36 = sbr.rel (0) target = $region13
    $region12: #{tpu_custom_call.1} parent=1 // pred_region
      _
    $region13: #{tpu_custom_call.1} parent=1 // pred_fallthru
      _
    // Predicated region
    $region14: #{tpu_custom_call.1} parent=1 // pred_check
      _
    $region15: #{tpu_custom_call.1} parent=1 // pred_check_branch
      %38 = sbr.rel (0) target = $region17
    $region16: #{tpu_custom_call.1} parent=1 // pred_region
      %39 = dma.done [#allocation4], 256
    $region17: #{tpu_custom_call.1} parent=1 // pred_fallthru
      _
    // Predicated region
    $region18: #{tpu_custom_call.1} parent=1 // pred_check
      _
    $region19: #{tpu_custom_call.1} parent=1 // pred_check_branch
      %41 = sbr.rel (0) target = $region21
    $region20: #{tpu_custom_call.1} parent=1 // pred_region
      %42 = dma.done [#allocation7], 512
    $region21: #{tpu_custom_call.1} parent=1 // pred_fallthru
      _
    %p44 = scmp.eq.s32.totalorder 0, 0
    // Predicated region
    $region22: #{tpu_custom_call.1} parent=1 // pred_check
      %p45 = pneg %p44
    $region23: #{tpu_custom_call.1} parent=1 // pred_check_branch
      %47 = sbr.rel (%p45) target = $region25
    $region24: #{tpu_custom_call.1} parent=1 // pred_region
      %vm48 = vcmask 785408
      %49 = vst.msk [vmem:[#allocation2] sm:$0xff] %vm48, 0.0
      %50 = vst.msk [vmem:[#allocation2 + $0x8] sm:$0xff] %vm48, 0.0
    $region25: #{tpu_custom_call.1} parent=1 // pred_fallthru
      _
    %v51 = vld [vmem:[#allocation2] sm:$0xff]
    %v52 = vld [vmem:[#allocation2 + $0x8] sm:$0xff]
    %v53 = vld [vmem:[#allocation3] sm:$0xff]
    %v54 = vld [vmem:[#allocation3 + $0x8] sm:$0xff]
    %v55 = vpack.c.bf16 %v54, %v53
    %v56 = vld [vmem:[#allocation6] sm:$0xff]
    %v57 = vld [vmem:[#allocation6 + $0x8] sm:$0xff]
    %v58 = vld [vmem:[#allocation6 + $0x10] sm:$0xff]
    %v59 = vld [vmem:[#allocation6 + $0x18] sm:$0xff]
    %v60 = vpack.c.bf16 %v57, %v56
    %v61 = vpack.c.bf16 %v59, %v58
    %vm62 = vcmask 261120
    %v64 = vsel %vm62, %v55, 0
    %66 = vmatprep.subr.bf16.mxu0 0
    %67 = vmatpush1.bf16.msra.mxu0 %v60
    %68 = vmatprep.subr.bf16.mxu0 0
    %69 = vmatpush1.bf16.msra.mxu0 %v61
    %70 = vmatprep.subr.bf16.mxu0 0
    %71 = vmatpush1.bf16.msra.mxu0 0
    %72 = vmatprep.subr.bf16.mxu0 0
    %73 = vmatpush1.bf16.msra.mxu0 0
    %74 = vmatprep.subr.bf16.mxu0 0
    %75 = vmatpush1.bf16.msra.mxu0 0
    %76 = vmatprep.subr.bf16.mxu0 0
    %77 = vmatpush1.bf16.msra.mxu0 0
    %78 = vmatprep.subr.bf16.mxu0 0
    %79 = vmatpush1.bf16.msra.mxu0 0
    %80 = vmatprep.subr.bf16.mxu0 0
    %81 = vmatpush1.bf16.msra.mxu0 0
    %82 = vmatprep.subr.bf16.mxu0 0
    %83 = vmatpush1.bf16.msra.mxu0 0
    %84 = vmatprep.subr.bf16.mxu0 0
    %85 = vmatpush1.bf16.msra.mxu0 0
    %86 = vmatprep.subr.bf16.mxu0 0
    %87 = vmatpush1.bf16.msra.mxu0 0
    %88 = vmatprep.subr.bf16.mxu0 0
    %89 = vmatpush1.bf16.msra.mxu0 0
    %90 = vmatprep.subr.bf16.mxu0 0
    %91 = vmatpush1.bf16.msra.mxu0 0
    %92 = vmatprep.subr.bf16.mxu0 0
    %93 = vmatpush1.bf16.msra.mxu0 0
    %94 = vmatprep.subr.bf16.mxu0 0
    %95 = vmatpush1.bf16.msra.mxu0 0
    %96 = vmatprep.subr.bf16.mxu0 0
    %97 = vmatpush1.bf16.msra.mxu0 0
    %98 = vmatprep.mubr.bf16.mxu0 0
    %99 = vmatmul.mubr.bf16.gmra.mrb[0].mxu0 %v64
    %v100 = vpop.f32.mrb[0].mxu0
    %v101 = vadd.f32 0.0, %v100
    %v102 = vpop.f32.mrb[0].mxu0
    %v103 = vpop.f32.mrb[0].mxu0
    %v104 = vadd.f32 0.0, %v103
    %v105 = vpop.f32.mrb[0].mxu0
    %106 = vdwg.mxu0
    %v107 = vadd.f32 %v51, %v101
    %v108 = vadd.f32 %v52, %v104
    %vm109 = vcmask 785408
    %110 = vst.msk [vmem:[#allocation2] sm:$0xff] %vm109, %v107
    %111 = vst.msk [vmem:[#allocation2 + $0x8] sm:$0xff] %vm109, %v108
    // Predicated region
    $region26: #{tpu_custom_call.1} parent=1 // pred_check
      %p112 = pneg %p44
    $region27: #{tpu_custom_call.1} parent=1 // pred_check_branch
      %114 = sbr.rel (%p112) target = $region29
    $region28: #{tpu_custom_call.1} parent=1 // pred_region
      %v115 = vld [vmem:[#allocation2] sm:$0xff]
      %v116 = vld [vmem:[#allocation2 + $0x8] sm:$0xff]
      %v117 = vld [vmem:[%s2] sm:$0x1]
      %v119 = vlaneseq
      %v120 = vshrl.u32 %v119, 7
      %v121 = vsub.s32 0, %v120
      %v122 = vrot.slane %v117, %v121
      %v124 = vadd.f32 %v115, %v122
      %v125 = vadd.f32 %v116, %v122
      %v126 = vpack.c.bf16 %v125, %v124
      %v128 = vunpack.c.l.b16 %v126
      %v129 = vunpack.c.h.b16 %v126
      %v130 = vpack.c.b16 %v128, %v128
      %v131 = vpack.c.b16 %v129, %v129
      %vm134 = vcmask 781312
      %135 = vst.msk [vmem:[#allocation8] sm:$0xf] %vm134, %v130
      %136 = vst.msk [vmem:[#allocation8 + $0x4] sm:$0xf] %vm134, %v131
    $region29: #{tpu_custom_call.1} parent=1 // pred_fallthru
      _
    // Predicated region
    $region30: #{tpu_custom_call.1} parent=1 // pred_check
      _
    $region31: #{tpu_custom_call.1} parent=1 // pred_check_branch
      %138 = sbr.rel (0) target = $region33
    $region32: #{tpu_custom_call.1} parent=1 // pred_region
      %s140 = ssub.s32 128, 128
      %141 = vsyncadd [#allocation5], %s140
      %s142 = sshll.u32 [#allocation8], 4
      %s143 = int_to_ptr.vmem [resolvable:$true] %s142
      %148 = dma.vmem_to_hbm [thread:$0]  %s143, 128, %s3, [#allocation5], 64, 64, 4
    $region33: #{tpu_custom_call.1} parent=1 // pred_fallthru
      _
    // Predicated region
    $region34: #{tpu_custom_call.1} parent=1 // pred_check
      _
    $region35: #{tpu_custom_call.1} parent=1 // pred_check_branch
      %150 = sbr.rel (0) target = $region37
    $region36: #{tpu_custom_call.1} parent=1 // pred_region
      %151 = dma.done [#allocation5], 128
    $region37: #{tpu_custom_call.1} parent=1 // pred_fallthru
      _
    %152 = vsyncpa [#allocation4], 1
    %153 = vsyncpa [#allocation7], 1
    %154 = vsyncpa [#allocation5], 1

</llo_original>
